<compile_context>
chip_gen: v7x
topology: tpu7x:2x2x1
jax: 0.10.0
libtpu: 0.0.40
codegen_flags: <defaults>
</compile_context>

<pallas_src>
import functools

import jax
import jax.numpy as jnp
from jax.experimental import pallas as pl
from jax.experimental.pallas import tpu as pltpu


def _fused_mlp_kernel(*refs):
    """refs = (x_ref, w0_ref, b0_ref, w1_ref, b1_ref, ..., o_ref).

    Unrolled [Linear -> ReLU] stack; activations stay in registers/VMEM,
    accumulation in f32, single store of the final activation.
    """
    x_ref = refs[0]
    o_ref = refs[-1]
    param_refs = refs[1:-1]

    h = x_ref[...].astype(jnp.float32)
    for i in range(0, len(param_refs), 2):
        w = param_refs[i][...]        # (Din_l, Dout_l) -- VMEM resident
        b = param_refs[i + 1][...]    # (1, Dout_l)     -- read once per layer
        h = jnp.dot(h, w, preferred_element_type=jnp.float32)  # MXU
        h = jnp.maximum(h + b, 0.0)                            # VPU (fused add+relu)
    o_ref[...] = h.astype(o_ref.dtype)


def _round_up(x, m):
    return ((x + m - 1) // m) * m


@functools.partial(jax.jit, static_argnames=("train", "tile_b"))
def embedding_mlp_forward(x, params, train=True, tile_b=512):
    """Fused Embedding_MLP forward (train flag is a no-op for forward math)."""
    batch, in_size = x.shape
    dout_last = params[-1][0].shape[1]

    # Batch tile: multiple of 8 sublanes.  Small batches -> one grid step
    # (tile == padded batch); large batches -> tile_b-row tiles.
    tile = min(tile_b, _round_up(batch, 8))
    padded = _round_up(batch, tile)
    if padded != batch:
        x = jnp.pad(x, ((0, padded - batch), (0, 0)))

    # Flatten params and build BlockSpecs.  Weights/biases get a constant
    # index_map so they are fetched once and stay resident across batch tiles.
    # Block shapes equal the full array dims, so the (8,128) divisibility rule
    # does not apply to them.
    flat_params = []
    in_specs = [pl.BlockSpec((tile, in_size), lambda i: (i, 0))]
    for w, b in params:
        din_l, dout_l = w.shape
        flat_params.append(w)
        flat_params.append(b)
        in_specs.append(pl.BlockSpec((din_l, dout_l), lambda i: (0, 0)))
        in_specs.append(pl.BlockSpec((1, dout_l), lambda i: (0, 0)))

    out = pl.pallas_call(
        _fused_mlp_kernel,
        out_shape=jax.ShapeDtypeStruct((padded, dout_last), x.dtype),
        grid_spec=pltpu.PrefetchScalarGridSpec(
            num_scalar_prefetch=0,
            grid=(padded // tile,),
            in_specs=in_specs,
            out_specs=pl.BlockSpec((tile, dout_last), lambda i: (i, 0)),
        ),
        compiler_params=pltpu.CompilerParams(
            # Batch tiles are independent -> megacore sharding where available.
            dimension_semantics=("parallel",),
        ),
    )(x, *flat_params)

    return out[:batch]


def init_embedding_mlp_params(key, in_size, layers, dtype=jnp.float32):
    """Deterministic synthetic parameters, shapes matching nn.Linear layers.
    Weights stored transposed: (in_features, out_features)."""
    params = []
    prev = in_size
    for l_size in layers:
        key, kw, kb = jax.random.split(key, 3)
        bound = 1.0 / jnp.sqrt(prev)  # mimic PyTorch default init range
        w = jax.random.uniform(kw, (prev, l_size), dtype, -bound, bound)
        b = jax.random.uniform(kb, (1, l_size), dtype, -bound, bound)
        params.append((w, b))
        prev = l_size
    return params


def embedding_mlp_reference(x, params):
    for w, b in params:
        x = jnp.maximum(x @ w + b, 0.0)
    return x


if __name__ == "__main__":
    key = jax.random.PRNGKey(0)
    key, kx = jax.random.split(key)

    # CoLight applies this MLP per node/intersection; flatten all nodes into
    # one batch.  37 rows -> padded to 40 (multiple of 8), single grid step.
    batch = 37
    in_size = 16
    layers = (32, 32)   # Embedding_MLP(in_size=16, layers=[32, 32])

    x = jax.random.normal(kx, (batch, in_size), jnp.float32)
    params = init_embedding_mlp_params(key, in_size, layers)

    out = embedding_mlp_forward(x, params, train=True)
    out = jax.block_until_ready(out)

    ref = embedding_mlp_reference(x, params)
    assert out.shape == (batch, layers[-1])
    assert jnp.allclose(out, ref, atol=1e-5, rtol=1e-5), "mismatch vs reference"

    print("KERNEL_OK")
</pallas_src>

<mosaic_0001>
module attributes {stable_mosaic.version = 11 : i64} {
  func.func @_fused_mlp_kernel(%arg0: i32, %arg1: memref<40x16xf32, #tpu.memory_space<vmem>>, %arg2: memref<16x32xf32, #tpu.memory_space<vmem>>, %arg3: memref<1x32xf32, #tpu.memory_space<vmem>>, %arg4: memref<32x32xf32, #tpu.memory_space<vmem>>, %arg5: memref<1x32xf32, #tpu.memory_space<vmem>>, %arg6: memref<40x32xf32, #tpu.memory_space<vmem>>) attributes {dimension_semantics = [#tpu.dimension_semantics<parallel>], iteration_bounds = array<i64: 1>, scalar_prefetch = 0 : i64, scratch_operands = 0 : i64, tpu.core_type = #tpu.core_type<tc>, window_params = [{transform_indices = @transform_0, window_bounds = array<i64: 40, 16>}, {pipeline_mode = #tpu.pipeline_mode<synchronous>, transform_indices = @transform_1, window_bounds = array<i64: 16, 32>}, {pipeline_mode = #tpu.pipeline_mode<synchronous>, transform_indices = @transform_2, window_bounds = array<i64: 1, 32>}, {pipeline_mode = #tpu.pipeline_mode<synchronous>, transform_indices = @transform_3, window_bounds = array<i64: 32, 32>}, {pipeline_mode = #tpu.pipeline_mode<synchronous>, transform_indices = @transform_4, window_bounds = array<i64: 1, 32>}, {transform_indices = @transform_5, window_bounds = array<i64: 40, 32>}]} {
    %c0 = arith.constant 0 : index
    %c0_0 = arith.constant 0 : index
    %0 = vector.load %arg1[%c0, %c0_0] : memref<40x16xf32, #tpu.memory_space<vmem>>, vector<40x16xf32>
    %c0_1 = arith.constant 0 : index
    %c0_2 = arith.constant 0 : index
    %1 = vector.load %arg2[%c0_1, %c0_2] : memref<16x32xf32, #tpu.memory_space<vmem>>, vector<16x32xf32>
    %c0_3 = arith.constant 0 : index
    %c0_4 = arith.constant 0 : index
    %2 = vector.load %arg3[%c0_3, %c0_4] : memref<1x32xf32, #tpu.memory_space<vmem>>, vector<1x32xf32>
    %cst = arith.constant dense<0.000000e+00> : vector<40x32xf32>
    %3 = tpu.matmul %0, %1, %cst {dimension_numbers = #tpu.dot_dimension_numbers<[1], [0], [0], [1], [0, 0, 1, 1], [], []>} : vector<40x16xf32>, vector<16x32xf32>, vector<40x32xf32> -> vector<40x32xf32>
    %4 = vector.broadcast %2 : vector<1x32xf32> to vector<40x32xf32>
    %5 = arith.addf %3, %4 : vector<40x32xf32>
    %cst_5 = arith.constant 0.000000e+00 : f32
    %6 = vector.broadcast %cst_5 : f32 to vector<40x32xf32>
    %7 = arith.maximumf %5, %6 : vector<40x32xf32>
    %c0_6 = arith.constant 0 : index
    %c0_7 = arith.constant 0 : index
    %8 = vector.load %arg4[%c0_6, %c0_7] : memref<32x32xf32, #tpu.memory_space<vmem>>, vector<32x32xf32>
    %c0_8 = arith.constant 0 : index
    %c0_9 = arith.constant 0 : index
    %9 = vector.load %arg5[%c0_8, %c0_9] : memref<1x32xf32, #tpu.memory_space<vmem>>, vector<1x32xf32>
    %cst_10 = arith.constant dense<0.000000e+00> : vector<40x32xf32>
    %10 = tpu.matmul %7, %8, %cst_10 {dimension_numbers = #tpu.dot_dimension_numbers<[1], [0], [0], [1], [0, 0, 1, 1], [], []>} : vector<40x32xf32>, vector<32x32xf32>, vector<40x32xf32> -> vector<40x32xf32>
    %11 = vector.broadcast %9 : vector<1x32xf32> to vector<40x32xf32>
    %12 = arith.addf %10, %11 : vector<40x32xf32>
    %cst_11 = arith.constant 0.000000e+00 : f32
    %13 = vector.broadcast %cst_11 : f32 to vector<40x32xf32>
    %14 = arith.maximumf %12, %13 : vector<40x32xf32>
    %c0_12 = arith.constant 0 : index
    %c0_13 = arith.constant 0 : index
    %15 = vector.load %arg6[%c0_12, %c0_13] : memref<40x32xf32, #tpu.memory_space<vmem>>, vector<40x32xf32>
    tpu.vector_store %arg6[%c0_12, %c0_13], %14 {strides = array<i32>} : memref<40x32xf32, #tpu.memory_space<vmem>>, vector<40x32xf32>,
    return
  }
  func.func @transform_0(%arg0: i32) -> (i32, i32) {
    %c0_i32 = arith.constant 0 : i32
    %c0_i32_0 = arith.constant 0 : i32
    return %arg0, %c0_i32 : i32, i32
  }
  func.func @transform_1(%arg0: i32) -> (i32, i32) {
    %c0_i32 = arith.constant 0 : i32
    %c0_i32_0 = arith.constant 0 : i32
    %c0_i32_1 = arith.constant 0 : i32
    return %c0_i32, %c0_i32_0 : i32, i32
  }
  func.func @transform_2(%arg0: i32) -> (i32, i32) {
    %c0_i32 = arith.constant 0 : i32
    %c0_i32_0 = arith.constant 0 : i32
    %c0_i32_1 = arith.constant 0 : i32
    return %c0_i32, %c0_i32_0 : i32, i32
  }
  func.func @transform_3(%arg0: i32) -> (i32, i32) {
    %c0_i32 = arith.constant 0 : i32
    %c0_i32_0 = arith.constant 0 : i32
    %c0_i32_1 = arith.constant 0 : i32
    return %c0_i32, %c0_i32_0 : i32, i32
  }
  func.func @transform_4(%arg0: i32) -> (i32, i32) {
    %c0_i32 = arith.constant 0 : i32
    %c0_i32_0 = arith.constant 0 : i32
    %c0_i32_1 = arith.constant 0 : i32
    return %c0_i32, %c0_i32_0 : i32, i32
  }
  func.func @transform_5(%arg0: i32) -> (i32, i32) {
    %c0_i32 = arith.constant 0 : i32
    %c0_i32_0 = arith.constant 0 : i32
    return %arg0, %c0_i32 : i32, i32
  }
}

</mosaic_0001>

<llo_original>
// kernel: embedding_mlp_forward.1
$region0: #{embedding_mlp_forward.1}
  #allocation0 [shape = 'u32[]', space=smem, size = 0x4, offset = 0x4, fixed_abs, tag = 'smem constant byte address 0x4 - core index']
  #allocation1 [shape = 'u32[144,128]{1,0:T(1,128)}', space=vmem, size = 0x12000, scoped, tag = 'internal scratch']
  %s0 = inlined_call_operand.vmem [shape: f32[40,16], index: 0, kind: input, shape index: {}]
  %s1 = inlined_call_operand.vmem [shape: f32[16,32], index: 1, kind: input, shape index: {}]
  %s2 = inlined_call_operand.vmem [shape: f32[1,32], index: 2, kind: input, shape index: {}]
  %s3 = inlined_call_operand.vmem [shape: f32[32,32], index: 3, kind: input, shape index: {}]
  %s4 = inlined_call_operand.vmem [shape: f32[1,32], index: 4, kind: input, shape index: {}]
  %s5 = inlined_call_operand.vmem [shape: f32[40,32], index: 5, kind: output, shape index: {}]
  %s6 = sld [smem:[#allocation0]]
  $region30: #{embedding_mlp_forward.1} parent=0
    _
  %s8 = ssub.s32 1, %s6
  %s9 = scalar_select 0, %s8, %s6
  // Predicated region
  $region2: #{embedding_mlp_forward.1} parent=0 // pred_check
    _
  $region3: #{embedding_mlp_forward.1} parent=0 // pred_check_branch
    %11 = sbr.rel (0) target = $region5
  $region4: #{embedding_mlp_forward.1} parent=0 // pred_region
    _
  $region5: #{embedding_mlp_forward.1} parent=0 // pred_fallthru
    _
  // Predicated region
  $region6: #{embedding_mlp_forward.1} parent=0 // pred_check
    _
  $region7: #{embedding_mlp_forward.1} parent=0 // pred_check_branch
    %13 = sbr.rel (0) target = $region9
  $region8: #{embedding_mlp_forward.1} parent=0 // pred_region
    _
  $region9: #{embedding_mlp_forward.1} parent=0 // pred_fallthru
    _
  // Predicated region
  $region10: #{embedding_mlp_forward.1} parent=0 // pred_check
    _
  $region11: #{embedding_mlp_forward.1} parent=0 // pred_check_branch
    %15 = sbr.rel (0) target = $region13
  $region12: #{embedding_mlp_forward.1} parent=0 // pred_region
    _
  $region13: #{embedding_mlp_forward.1} parent=0 // pred_fallthru
    _
  // Predicated region
  $region14: #{embedding_mlp_forward.1} parent=0 // pred_check
    _
  $region15: #{embedding_mlp_forward.1} parent=0 // pred_check_branch
    %17 = sbr.rel (0) target = $region17
  $region16: #{embedding_mlp_forward.1} parent=0 // pred_region
    _
  $region17: #{embedding_mlp_forward.1} parent=0 // pred_fallthru
    _
  // Predicated region
  $region18: #{embedding_mlp_forward.1} parent=0 // pred_check
    _
  $region19: #{embedding_mlp_forward.1} parent=0 // pred_check_branch
    %19 = sbr.rel (0) target = $region21
  $region20: #{embedding_mlp_forward.1} parent=0 // pred_region
    _
  $region21: #{embedding_mlp_forward.1} parent=0 // pred_fallthru
    _
  %v20 = vld [vmem:[%s0] sm:$0xff]
  %v21 = vld [vmem:[%s0 + $0x8] sm:$0xff]
  %v22 = vld [vmem:[%s0 + $0x10] sm:$0xff]
  %v23 = vld [vmem:[%s0 + $0x18] sm:$0xff]
  %v24 = vld [vmem:[%s0 + $0x20] sm:$0xff]
  %v25 = vld [vmem:[%s1] sm:$0xff]
  %v26 = vld [vmem:[%s1 + $0x8] sm:$0xff]
  %v27 = vld [vmem:[%s2] sm:$0x1]
  %v29 = vlaneseq
  %v30 = vshrl.u32 %v29, 7
  %v31 = vsub.s32 0, %v30
  %v32 = vrot.slane %v27, %v31
  %vm34 = vcmask 130048
  %v36 = vsel %vm34, %v20, 0
  %v39 = vsel %vm34, %v21, 0
  %v42 = vsel %vm34, %v22, 0
  %v45 = vsel %vm34, %v23, 0
  %v48 = vsel %vm34, %v24, 0
  %50 = vmatprep.subr.mxu0 0.0
  %51 = vmatpush1.msra.mxu0 %v25
  %52 = vmatprep.subr.mxu0 0.0
  %53 = vmatpush1.msra.mxu0 %v26
  %54 = vmatprep.subr.mxu0 0.0
  %55 = vmatpush1.msra.mxu0 0.0
  %56 = vmatprep.subr.mxu0 0.0
  %57 = vmatpush1.msra.mxu0 0.0
  %58 = vmatprep.subr.mxu0 0.0
  %59 = vmatpush1.msra.mxu0 0.0
  %60 = vmatprep.subr.mxu0 0.0
  %61 = vmatpush1.msra.mxu0 0.0
  %62 = vmatprep.subr.mxu0 0.0
  %63 = vmatpush1.msra.mxu0 0.0
  %64 = vmatprep.subr.mxu0 0.0
  %65 = vmatpush1.msra.mxu0 0.0
  %66 = vmatprep.subr.mxu0 0.0
  %67 = vmatpush1.msra.mxu0 0.0
  %68 = vmatprep.subr.mxu0 0.0
  %69 = vmatpush1.msra.mxu0 0.0
  %70 = vmatprep.subr.mxu0 0.0
  %71 = vmatpush1.msra.mxu0 0.0
  %72 = vmatprep.subr.mxu0 0.0
  %73 = vmatpush1.msra.mxu0 0.0
  %74 = vmatprep.subr.mxu0 0.0
  %75 = vmatpush1.msra.mxu0 0.0
  %76 = vmatprep.subr.mxu0 0.0
  %77 = vmatpush1.msra.mxu0 0.0
  %78 = vmatprep.subr.mxu0 0.0
  %79 = vmatpush1.msra.mxu0 0.0
  %80 = vmatprep.subr.mxu0 0.0
  %81 = vmatpush1.msra.mxu0 0.0
  %82 = vmatprep.subr.mxu0 0.0
  %83 = vmatpush1.msra.mxu0 0.0
  %84 = vmatprep.subr.mxu0 0.0
  %85 = vmatpush1.msra.mxu0 0.0
  %86 = vmatprep.subr.mxu0 0.0
  %87 = vmatpush1.msra.mxu0 0.0
  %88 = vmatprep.subr.mxu0 0.0
  %89 = vmatpush1.msra.mxu0 0.0
  %90 = vmatprep.subr.mxu0 0.0
  %91 = vmatpush1.msra.mxu0 0.0
  %92 = vmatprep.subr.mxu0 0.0
  %93 = vmatpush1.msra.mxu0 0.0
  %94 = vmatprep.subr.mxu0 0.0
  %95 = vmatpush1.msra.mxu0 0.0
  %96 = vmatprep.subr.mxu0 0.0
  %97 = vmatpush1.msra.mxu0 0.0
  %98 = vmatprep.subr.mxu0 0.0
  %99 = vmatpush1.msra.mxu0 0.0
  %100 = vmatprep.subr.mxu0 0.0
  %101 = vmatpush1.msra.mxu0 0.0
  %102 = vmatprep.subr.mxu0 0.0
  %103 = vmatpush1.msra.mxu0 0.0
  %104 = vmatprep.subr.mxu0 0.0
  %105 = vmatpush1.msra.mxu0 0.0
  %106 = vmatprep.subr.mxu0 0.0
  %107 = vmatpush1.msra.mxu0 0.0
  %108 = vmatprep.subr.mxu0 0.0
  %109 = vmatpush1.msra.mxu0 0.0
  %110 = vmatprep.subr.mxu0 0.0
  %111 = vmatpush1.msra.mxu0 0.0
  %112 = vmatprep.subr.mxu0 0.0
  %113 = vmatpush1.msra.mxu0 0.0
  %114 = vmatprep.mubr.f32.mxu0 0.0
  %115 = vmatmul.mubr.f32.gmra.mrb[0].mxu0 %v36
  %v116 = vpop.f32.mrb[0].mxu0
  %v117 = vadd.f32 %v32, %v116
  %v118 = vpop.f32.mrb[0].mxu0
  %119 = vmatprep.mubr.f32.mxu0 0.0
  %120 = vmatmul.mubr.f32.gmra.mrb[0].mxu0 %v39
  %v121 = vpop.f32.mrb[0].mxu0
  %v122 = vadd.f32 %v32, %v121
  %v123 = vpop.f32.mrb[0].mxu0
  %124 = vmatprep.mubr.f32.mxu0 0.0
  %125 = vmatmul.mubr.f32.gmra.mrb[0].mxu0 %v42
  %v126 = vpop.f32.mrb[0].mxu0
  %v127 = vadd.f32 %v32, %v126
  %v128 = vpop.f32.mrb[0].mxu0
  %129 = vmatprep.mubr.f32.mxu0 0.0
  %130 = vmatmul.mubr.f32.gmra.mrb[0].mxu0 %v45
  %v131 = vpop.f32.mrb[0].mxu0
  %v132 = vadd.f32 %v32, %v131
  %v133 = vpop.f32.mrb[0].mxu0
  %134 = vmatprep.mubr.f32.mxu0 0.0
  %135 = vmatmul.mubr.f32.gmra.mrb[0].mxu0 %v48
  %v136 = vpop.f32.mrb[0].mxu0
  %v137 = vadd.f32 %v32, %v136
  %v138 = vpop.f32.mrb[0].mxu0
  %139 = vdwg.mxu0
  %v140 = vmax.f32 %v117, 0.0
  %v141 = vmax.f32 %v122, 0.0
  %v142 = vmax.f32 %v127, 0.0
  %v143 = vmax.f32 %v132, 0.0
  %v144 = vmax.f32 %v137, 0.0
  %v145 = vld [vmem:[%s3] sm:$0xff]
  %v146 = vld [vmem:[%s3 + $0x8] sm:$0xff]
  %v147 = vld [vmem:[%s3 + $0x10] sm:$0xff]
  %v148 = vld [vmem:[%s3 + $0x18] sm:$0xff]
  %v149 = vld [vmem:[%s4] sm:$0x1]
  %v151 = vlaneseq
  %v152 = vshrl.u32 %v151, 7
  %v153 = vsub.s32 0, %v152
  %v154 = vrot.slane %v149, %v153
  %vm156 = vcmask 261120
  %v158 = vsel %vm156, %v140, 0
  %v161 = vsel %vm156, %v141, 0
  %v164 = vsel %vm156, %v142, 0
  %v167 = vsel %vm156, %v143, 0
  %v170 = vsel %vm156, %v144, 0
  %172 = vmatprep.subr.mxu0 0.0
  %173 = vmatpush1.msra.mxu0 %v145
  %174 = vmatprep.subr.mxu0 0.0
  %175 = vmatpush1.msra.mxu0 %v146
  %176 = vmatprep.subr.mxu0 0.0
  %177 = vmatpush1.msra.mxu0 %v147
  %178 = vmatprep.subr.mxu0 0.0
  %179 = vmatpush1.msra.mxu0 %v148
  %180 = vmatprep.subr.mxu0 0.0
  %181 = vmatpush1.msra.mxu0 0.0
  %182 = vmatprep.subr.mxu0 0.0
  %183 = vmatpush1.msra.mxu0 0.0
  %184 = vmatprep.subr.mxu0 0.0
  %185 = vmatpush1.msra.mxu0 0.0
  %186 = vmatprep.subr.mxu0 0.0
  %187 = vmatpush1.msra.mxu0 0.0
  %188 = vmatprep.subr.mxu0 0.0
  %189 = vmatpush1.msra.mxu0 0.0
  %190 = vmatprep.subr.mxu0 0.0
  %191 = vmatpush1.msra.mxu0 0.0
  %192 = vmatprep.subr.mxu0 0.0
  %193 = vmatpush1.msra.mxu0 0.0
  %194 = vmatprep.subr.mxu0 0.0
  %195 = vmatpush1.msra.mxu0 0.0
  %196 = vmatprep.subr.mxu0 0.0
  %197 = vmatpush1.msra.mxu0 0.0
  %198 = vmatprep.subr.mxu0 0.0
  %199 = vmatpush1.msra.mxu0 0.0
  %200 = vmatprep.subr.mxu0 0.0
  %201 = vmatpush1.msra.mxu0 0.0
  %202 = vmatprep.subr.mxu0 0.0
  %203 = vmatpush1.msra.mxu0 0.0
  %204 = vmatprep.subr.mxu0 0.0
  %205 = vmatpush1.msra.mxu0 0.0
  %206 = vmatprep.subr.mxu0 0.0
  %207 = vmatpush1.msra.mxu0 0.0
  %208 = vmatprep.subr.mxu0 0.0
  %209 = vmatpush1.msra.mxu0 0.0
  %210 = vmatprep.subr.mxu0 0.0
  %211 = vmatpush1.msra.mxu0 0.0
  %212 = vmatprep.subr.mxu0 0.0
  %213 = vmatpush1.msra.mxu0 0.0
  %214 = vmatprep.subr.mxu0 0.0
  %215 = vmatpush1.msra.mxu0 0.0
  %216 = vmatprep.subr.mxu0 0.0
  %217 = vmatpush1.msra.mxu0 0.0
  %218 = vmatprep.subr.mxu0 0.0
  %219 = vmatpush1.msra.mxu0 0.0
  %220 = vmatprep.subr.mxu0 0.0
  %221 = vmatpush1.msra.mxu0 0.0
  %222 = vmatprep.subr.mxu0 0.0
  %223 = vmatpush1.msra.mxu0 0.0
  %224 = vmatprep.subr.mxu0 0.0
  %225 = vmatpush1.msra.mxu0 0.0
  %226 = vmatprep.subr.mxu0 0.0
  %227 = vmatpush1.msra.mxu0 0.0
  %228 = vmatprep.subr.mxu0 0.0
  %229 = vmatpush1.msra.mxu0 0.0
  %230 = vmatprep.subr.mxu0 0.0
  %231 = vmatpush1.msra.mxu0 0.0
  %232 = vmatprep.subr.mxu0 0.0
  %233 = vmatpush1.msra.mxu0 0.0
  %234 = vmatprep.subr.mxu0 0.0
  %235 = vmatpush1.msra.mxu0 0.0
  %236 = vmatprep.mubr.f32.mxu0 0.0
  %237 = vmatmul.mubr.f32.gmra.mrb[0].mxu0 %v158
  %v238 = vpop.f32.mrb[0].mxu0
  %v239 = vadd.f32 %v154, %v238
  %v240 = vpop.f32.mrb[0].mxu0
  %241 = vmatprep.mubr.f32.mxu0 0.0
  %242 = vmatmul.mubr.f32.gmra.mrb[0].mxu0 %v161
  %v243 = vpop.f32.mrb[0].mxu0
  %v244 = vadd.f32 %v154, %v243
  %v245 = vpop.f32.mrb[0].mxu0
  %246 = vmatprep.mubr.f32.mxu0 0.0
  %247 = vmatmul.mubr.f32.gmra.mrb[0].mxu0 %v164
  %v248 = vpop.f32.mrb[0].mxu0
  %v249 = vadd.f32 %v154, %v248
  %v250 = vpop.f32.mrb[0].mxu0
  %251 = vmatprep.mubr.f32.mxu0 0.0
  %252 = vmatmul.mubr.f32.gmra.mrb[0].mxu0 %v167
  %v253 = vpop.f32.mrb[0].mxu0
  %v254 = vadd.f32 %v154, %v253
  %v255 = vpop.f32.mrb[0].mxu0
  %256 = vmatprep.mubr.f32.mxu0 0.0
  %257 = vmatmul.mubr.f32.gmra.mrb[0].mxu0 %v170
  %v258 = vpop.f32.mrb[0].mxu0
  %v259 = vadd.f32 %v154, %v258
  %v260 = vpop.f32.mrb[0].mxu0
  %261 = vdwg.mxu0
  %v262 = vmax.f32 %v239, 0.0
  %v263 = vmax.f32 %v244, 0.0
  %v264 = vmax.f32 %v249, 0.0
  %v265 = vmax.f32 %v254, 0.0
  %v266 = vmax.f32 %v259, 0.0
  %267 = vst.msk [vmem:[%s5] sm:$0xff] %vm156, %v262
  %268 = vst.msk [vmem:[%s5 + $0x8] sm:$0xff] %vm156, %v263
  %269 = vst.msk [vmem:[%s5 + $0x10] sm:$0xff] %vm156, %v264
  %270 = vst.msk [vmem:[%s5 + $0x18] sm:$0xff] %vm156, %v265
  %271 = vst.msk [vmem:[%s5 + $0x20] sm:$0xff] %vm156, %v266
  // Predicated region
  $region22: #{embedding_mlp_forward.1} parent=0 // pred_check
    _
  $region23: #{embedding_mlp_forward.1} parent=0 // pred_check_branch
    %273 = sbr.rel (0) target = $region25
  $region24: #{embedding_mlp_forward.1} parent=0 // pred_region
    _
  $region25: #{embedding_mlp_forward.1} parent=0 // pred_fallthru
    _
  // Predicated region
  $region26: #{embedding_mlp_forward.1} parent=0 // pred_check
    _
  $region27: #{embedding_mlp_forward.1} parent=0 // pred_check_branch
    %275 = sbr.rel (0) target = $region29
  $region28: #{embedding_mlp_forward.1} parent=0 // pred_region
    _
  $region29: #{embedding_mlp_forward.1} parent=0 // pred_fallthru
    _

</llo_original>
